<compile_context>
chip_gen: v5e
topology: v5e:2x2
jax: 0.10.0
libtpu: 0.0.40
codegen_flags: <defaults>
</compile_context>

<pallas_src>
import math
import collections
import functools

import numpy as np
import jax
import jax.numpy as jnp
from jax.experimental import pallas as pl
from jax.experimental.pallas import tpu as pltpu

CONTRASTIVE_LOSS_COEF = 0.05
DIVERSITY_LOSS_COEF = 0.02
Q_LOSS_COEF = 0.01


# ----------------------------------------------------------------------------
# in-kernel helpers
# ----------------------------------------------------------------------------
def _mm(a, b):
    """MXU matmul: bf16 operands, f32 accumulation."""
    return jnp.dot(a.astype(jnp.bfloat16), b.astype(jnp.bfloat16),
                   preferred_element_type=jnp.float32)


def _ln(x, g, b, eps=1e-5):
    mu = jnp.mean(x, axis=-1, keepdims=True)
    var = jnp.mean((x - mu) ** 2, axis=-1, keepdims=True)
    return (x - mu) * jax.lax.rsqrt(var + eps) * g + b


def _gelu(x):
    # exact (erf-based) GELU, matching nn.GELU() / F.gelu default
    return 0.5 * x * (1.0 + jax.lax.erf(x * (1.0 / math.sqrt(2.0))))


def _next_pow2(n):
    return 1 if n <= 1 else 1 << (n - 1).bit_length()


# ----------------------------------------------------------------------------
# Kernel 1: embedding scale + positional encoding + input LayerNorm (+ summary)
# ----------------------------------------------------------------------------
def _embed_norm_kernel(emb_ref, pe_ref, g_ref, b_ref, x_ref, s_ref):
    D = emb_ref.shape[-1]
    x = emb_ref[...] * math.sqrt(D) + pe_ref[...]
    xn = _ln(x, g_ref[...], b_ref[...])
    x_ref[...] = xn
    s_ref[...] = jnp.mean(xn, axis=1, keepdims=True)


@jax.jit
def embed_stage(embedding, pe, gamma, beta, input_ids):
    B, S = input_ids.shape
    D = embedding.shape[1]
    emb = jnp.take(embedding, input_ids, axis=0)                  # (B, S, D)
    pe_s = pe[:S].reshape(1, S, D)
    # process as many sequences per grid step as fit a ~4 MB block
    GB = max(1, min(B, (4 << 20) // max(1, S * D * 4)))
    nb = -(-B // GB)
    x, s = pl.pallas_call(
        _embed_norm_kernel,
        out_shape=(jax.ShapeDtypeStruct((B, S, D), jnp.float32),
                   jax.ShapeDtypeStruct((B, 1, D), jnp.float32)),
        grid=(nb,),
        in_specs=[pl.BlockSpec((GB, S, D), lambda i: (i, 0, 0)),
                  pl.BlockSpec((1, S, D), lambda i: (0, 0, 0)),
                  pl.BlockSpec((1, D), lambda i: (0, 0)),
                  pl.BlockSpec((1, D), lambda i: (0, 0))],
        out_specs=[pl.BlockSpec((GB, S, D), lambda i: (i, 0, 0)),
                   pl.BlockSpec((GB, 1, D), lambda i: (i, 0, 0))],
        compiler_params=pltpu.CompilerParams(
            dimension_semantics=("parallel",)),
    )(emb, pe_s, gamma.reshape(1, D), beta.reshape(1, D))
    return x, s.reshape(B, D)


# ----------------------------------------------------------------------------
# Kernel 2: fused routing controller (fc1 -> gelu -> fc2 -> +q -> LN -> clamp
#           -> mask -> softmax).  f32 matmuls + exact softmax (decision path).
# ----------------------------------------------------------------------------
def _router_kernel(s_ref, w1_ref, b1_ref, w2_ref, b2_ref, q_ref, g_ref, be_ref,
                   m_ref, logit_ref, prob_ref):
    x = s_ref[...]
    h = _gelu(jnp.dot(x, w1_ref[...], preferred_element_type=jnp.float32)
              + b1_ref[...])
    logits = jnp.dot(h, w2_ref[...], preferred_element_type=jnp.float32) + b2_ref[...]
    ln = _ln(logits + q_ref[...], g_ref[...], be_ref[...])
    clamped = jnp.clip(ln, -10.0, 10.0)
    # terminate column is never masked, so at least one finite entry per row
    final = jnp.where(m_ref[...] > 0.5, -jnp.inf, clamped)
    logit_ref[...] = final
    mx = jnp.max(final, axis=-1, keepdims=True)
    e = jnp.exp(final - mx)
    prob_ref[...] = e / jnp.sum(e, axis=-1, keepdims=True)


@jax.jit
def router_step(summaries_ext, act_idx, mask_f, valid, rp):
    summary = summaries_ext[act_idx]                              # (Apad, D)
    A, D = summary.shape
    RH = rp['fc1_w'].shape[1]
    Ep1 = rp['fc2_w'].shape[1]
    logits, probs = pl.pallas_call(
        _router_kernel,
        out_shape=(jax.ShapeDtypeStruct((A, Ep1), jnp.float32),
                   jax.ShapeDtypeStruct((A, Ep1), jnp.float32)),
        grid=(1,),
        in_specs=[pl.BlockSpec((A, D), lambda i: (0, 0)),
                  pl.BlockSpec((D, RH), lambda i: (0, 0)),
                  pl.BlockSpec((1, RH), lambda i: (0, 0)),
                  pl.BlockSpec((RH, Ep1), lambda i: (0, 0)),
                  pl.BlockSpec((1, Ep1), lambda i: (0, 0)),
                  pl.BlockSpec((1, Ep1), lambda i: (0, 0)),
                  pl.BlockSpec((1, Ep1), lambda i: (0, 0)),
                  pl.BlockSpec((1, Ep1), lambda i: (0, 0)),
                  pl.BlockSpec((A, Ep1), lambda i: (0, 0))],
        out_specs=[pl.BlockSpec((A, Ep1), lambda i: (0, 0)),
                   pl.BlockSpec((A, Ep1), lambda i: (0, 0))],
    )(summary, rp['fc1_w'], rp['fc1_b'].reshape(1, RH),
      rp['fc2_w'], rp['fc2_b'].reshape(1, Ep1),
      rp['q_values'].reshape(1, Ep1),
      rp['norm'][0].reshape(1, Ep1), rp['norm'][1].reshape(1, Ep1),
      mask_f)
    # stats over VALID (non-padded) rows only
    E = Ep1 - 1
    v = valid[:, 0]
    nvalid = jnp.sum(v)
    row_ent = -jnp.sum(probs * jnp.log(probs + 1e-10), axis=1)
    step_entropy = jnp.sum(row_ent * v) / nvalid
    avg_p = jnp.sum(probs[:, :E] * valid, axis=0) / nvalid
    ent_means = -jnp.sum(avg_p * jnp.log(avg_p + 1e-10))
    actions = jnp.argmax(logits, axis=1)
    return actions, step_entropy, ent_means


# ----------------------------------------------------------------------------
# Kernel 3: fused expert.  grid = (groups, layers); each group is G same-expert
#           sequences processed as one (G*S, D) slab; the layer axis streams one
#           layer's weight block at a time; state carried in VMEM scratch.
# ----------------------------------------------------------------------------
def _expert_kernel(eids_ref, x_ref, wqkv_ref, bqkv_ref, wout_ref, wgate_ref,
                   w1_ref, b1_ref, w2_ref, vec_ref, y_ref, sum_ref, xc_ref,
                   *, nhead, G, S):
    del eids_ref  # expert routing already applied by the weight index_maps
    l = pl.program_id(1)
    nl = pl.num_programs(1)
    D = y_ref.shape[-1]
    hd = D // nhead
    GS = G * S

    @pl.when(l == 0)
    def _():
        xc_ref[...] = x_ref[0]

    # packed per-layer vectors: rows = [ln1_g, ln1_b, b_out, b_gate, gn_g, gn_b,
    #                                   ln2_g, ln2_b, b2, tag]
    vec = vec_ref[0, 0]                                           # (10, D)
    ln1_g, ln1_b = vec[0:1], vec[1:2]
    b_out, b_gate = vec[2:3], vec[3:4]
    gn_g, gn_b = vec[4:5], vec[5:6]
    ln2_g, ln2_b = vec[6:7], vec[7:8]
    b2, tag = vec[8:9], vec[9:10]

    x = xc_ref[...]                                               # (G*S, D)

    # --- GatedAttention(norm1(x)) ---
    xn = _ln(x, ln1_g, ln1_b)
    qkv = _mm(xn, wqkv_ref[0, 0]) + bqkv_ref[0, 0]                # (G*S, 3D)
    wout = wout_ref[0, 0]                                         # (D, D) bf16
    attn = jnp.zeros((GS, D), jnp.float32)
    for h in range(nhead):                                        # static head unroll
        q = qkv[:, h * hd:(h + 1) * hd].reshape(G, S, hd)         # scale pre-folded
        k = qkv[:, D + h * hd:D + (h + 1) * hd].reshape(G, S, hd)
        v = qkv[:, 2 * D + h * hd:2 * D + (h + 1) * hd].reshape(G, S, hd)
        sc = jnp.einsum('gqd,gkd->gqk', q.astype(jnp.bfloat16),
                        k.astype(jnp.bfloat16),
                        preferred_element_type=jnp.float32)       # (G, S, S)
        sc = sc - jnp.max(sc, axis=-1, keepdims=True)
        p = jnp.exp(sc)
        p = p * pl.reciprocal(jnp.sum(p, axis=-1, keepdims=True), approx=True)
        ctx = jnp.einsum('gqk,gkd->gqd', p.astype(jnp.bfloat16),
                         v.astype(jnp.bfloat16),
                         preferred_element_type=jnp.float32)      # (G, S, hd)
        # out-proj as split matmul (no lane concat of heads)
        attn = attn + _mm(ctx.reshape(GS, hd), wout[h * hd:(h + 1) * hd, :])
    attn = attn + b_out

    # gate([xn; attn]) as split matmul (no lane concat)
    wgate = wgate_ref[0, 0]                                       # (2D, D) bf16
    gate = jax.nn.sigmoid(_mm(xn, wgate[:D, :]) + _mm(attn, wgate[D:, :]) + b_gate)
    x = x + _ln(xn + gate * attn, gn_g, gn_b)                     # dropout = identity

    # --- FFN(norm2(x)) ---
    xn2 = _ln(x, ln2_g, ln2_b)
    h1 = _gelu(_mm(xn2, w1_ref[0, 0]) + b1_ref[0, 0])
    x = x + _mm(h1, w2_ref[0, 0]) + b2

    xc_ref[...] = x

    @pl.when(l == nl - 1)
    def _():
        xf = x + tag                                              # specialization tag
        y_ref[0] = xf
        sum_ref[0] = jnp.mean(xf.reshape(G, S, D), axis=1)


@functools.partial(jax.jit, static_argnames=('nhead', 'G', 'S'))
def expert_step(ew, group_eids, seq_idx, reps_ext, summaries_ext, *, nhead, G, S):
    """Gather grouped same-expert sequences, run the fused expert, scatter back."""
    D = reps_ext.shape[-1]
    x = reps_ext[seq_idx]                                         # (NG*G, S, D)
    NG = x.shape[0] // G
    x = x.reshape(NG, G * S, D)
    L = ew['w_qkv'].shape[1]
    F_ = ew['w1'].shape[-1]
    NV = ew['vec'].shape[2]

    def xmap(g, l, eids):
        return (g, 0, 0)

    def wmap(g, l, eids):
        return (eids[g], l, 0, 0)

    in_specs = [
        pl.BlockSpec((1, G * S, D), xmap),
        pl.BlockSpec((1, 1, D, 3 * D), wmap),       # w_qkv   (bf16)
        pl.BlockSpec((1, 1, 1, 3 * D), wmap),       # b_qkv
        pl.BlockSpec((1, 1, D, D), wmap),           # w_out   (bf16)
        pl.BlockSpec((1, 1, 2 * D, D), wmap),       # w_gate  (bf16)
        pl.BlockSpec((1, 1, D, F_), wmap),          # w1      (bf16)
        pl.BlockSpec((1, 1, 1, F_), wmap),          # b1
        pl.BlockSpec((1, 1, F_, D), wmap),          # w2      (bf16)
        pl.BlockSpec((1, 1, NV, D), wmap),          # packed LN params / biases / tag
    ]
    out_specs = [
        pl.BlockSpec((1, G * S, D), xmap),
        pl.BlockSpec((1, G, D), xmap),
    ]

    # explicit VMEM budget (per-layer weight block, double-buffered) -> portable to v7x
    west = (3 * D * D + D * D + 2 * D * D + 2 * D * F_) * 2 + (3 * D + F_ + NV * D) * 4
    actb = G * S * (3 * D + F_ + 6 * D) * 4
    est = 2 * (west + 2 * G * S * D * 4 + G * D * 4) + G * S * D * 4 + actb
    vmem_limit = int(min(max(est + (8 << 20), 32 << 20), 64 << 20))

    y, s = pl.pallas_call(
        functools.partial(_expert_kernel, nhead=nhead, G=G, S=S),
        out_shape=(jax.ShapeDtypeStruct((NG, G * S, D), jnp.float32),
                   jax.ShapeDtypeStruct((NG, G, D), jnp.float32)),
        grid_spec=pltpu.PrefetchScalarGridSpec(
            num_scalar_prefetch=1, grid=(NG, L),
            in_specs=in_specs, out_specs=out_specs,
            scratch_shapes=[pltpu.VMEM((G * S, D), jnp.float32)]),
        compiler_params=pltpu.CompilerParams(
            dimension_semantics=("parallel", "arbitrary"),
            vmem_limit_bytes=vmem_limit),
    )(group_eids, x,
      ew['w_qkv'], ew['b_qkv'], ew['w_out'], ew['w_gate'],
      ew['w1'], ew['b1'], ew['w2'], ew['vec'])

    y = y.reshape(NG * G, S, D)
    s = s.reshape(NG * G, D)
    # padded slots point at the dummy row (index B) and are discarded
    reps_ext = reps_ext.at[seq_idx].set(y)
    summaries_ext = summaries_ext.at[seq_idx].set(s)
    return reps_ext, summaries_ext


# ----------------------------------------------------------------------------
# Kernel 4: final LayerNorm + lm_head, tiled over the vocab axis
# ----------------------------------------------------------------------------
def _final_head_kernel(s_ref, g_ref, b_ref, w_ref, bias_ref, o_ref):
    x = _ln(s_ref[...], g_ref[...], b_ref[...])
    o_ref[...] = (jnp.dot(x.astype(jnp.bfloat16), w_ref[...],
                          preferred_element_type=jnp.float32) + bias_ref[...])


@jax.jit
def final_head(summaries, gamma, beta, w, bias):
    B, D = summaries.shape
    V = w.shape[1]
    TV = V if V <= 2048 else 2048                                 # 2048 % 128 == 0
    nv = -(-V // TV)
    est = 2 * (B * D * 4 + D * TV * 2 + TV * 4 + B * TV * 4) + (4 << 20)
    return pl.pallas_call(
        _final_head_kernel,
        out_shape=jax.ShapeDtypeStruct((B, V), jnp.float32),
        grid=(nv,),
        in_specs=[pl.BlockSpec((B, D), lambda j: (0, 0)),
                  pl.BlockSpec((1, D), lambda j: (0, 0)),
                  pl.BlockSpec((1, D), lambda j: (0, 0)),
                  pl.BlockSpec((D, TV), lambda j: (0, j)),
                  pl.BlockSpec((1, TV), lambda j: (0, j))],
        out_specs=pl.BlockSpec((B, TV), lambda j: (0, j)),
        compiler_params=pltpu.CompilerParams(
            dimension_semantics=("parallel",),
            vmem_limit_bytes=int(min(max(est, 32 << 20), 64 << 20))),
    )(summaries, gamma.reshape(1, D), beta.reshape(1, D), w, bias.reshape(1, V))


# ----------------------------------------------------------------------------
# GoEModel.forward (eval mode)
# ----------------------------------------------------------------------------
def goe_forward(params, cfg, input_ids):
    """GoEModel.forward (eval mode). input_ids: (B, S) int32."""
    B, S = input_ids.shape
    E = cfg['num_experts']
    nhead = cfg['nhead']
    D = cfg['embed_dim']

    reps, summaries = embed_stage(
        params['embedding'], params['pe'],
        params['input_norm'][0], params['input_norm'][1], input_ids)

    # dummy row (index B) absorbs padded dispatch slots
    reps_ext = jnp.concatenate([reps, jnp.zeros((1, S, D), jnp.float32)], axis=0)
    summaries_ext = jnp.concatenate([summaries, jnp.zeros((1, D), jnp.float32)], axis=0)
    DUMMY = B

    # sequences per expert group: aim for ~128 matmul rows per grid step
    G = max(1, min(B, max(1, 128 // max(1, S))))

    paths = [[] for _ in range(B)]
    visit_counts = np.zeros((B, E), dtype=np.int64)
    usage = collections.Counter()
    active = list(range(B))
    total_entropy = jnp.float32(0.0)
    total_diversity = jnp.float32(0.0)
    rp = params['router']
    ew = params['experts']

    for _step in range(cfg['max_path_len']):
        if not active:
            break
        A = len(active)
        Apad = max(8, _next_pow2(A))                  # bucket -> bounded recompiles
        act_idx = np.full((Apad,), DUMMY, np.int32)
        act_idx[:A] = active
        mask = np.zeros((Apad, E + 1), np.float32)
        mask[:A, :E] = (visit_counts[active] >= cfg['max_visits_per_expert'])
        valid = np.zeros((Apad, 1), np.float32)
        valid[:A, 0] = 1.0

        actions, step_entropy, ent_means = router_step(
            summaries_ext, jnp.asarray(act_idx), jnp.asarray(mask),
            jnp.asarray(valid), rp)
        total_entropy = total_entropy + step_entropy

        # diversity loss: -entropy(mean expert probs) + 0.1 * var(usage proportions)
        total_usage = float(sum(usage.values())) + 1e-10
        lb = 0.0
        if total_usage > 1e-9:
            props = np.array([usage.get(i, 0) / total_usage for i in range(E)],
                             dtype=np.float64)
            lb = float(np.var(props, ddof=1))             # torch.var (unbiased)
        total_diversity = total_diversity + (-ent_means + 0.1 * lb)

        # one tiny (Apad,) host transfer per step (paths are Python lists)
        actions_np = np.asarray(jax.device_get(actions))[:A]
        per_expert = collections.defaultdict(list)
        for pos, orig in enumerate(active):
            a = int(actions_np[pos])
            if a == E:
                paths[orig].append('T')
            else:
                paths[orig].append(a)
                visit_counts[orig, a] += 1
                usage[a] += 1
                per_expert[a].append(orig)
        if not per_expert:
            active = []
            break

        # sort dispatches by expert id (weight-block DMA reuse) and pack into groups
        group_eids, seq_idx, cont = [], [], []
        for e in sorted(per_expert):
            lst = per_expert[e]
            cont.extend(lst)
            ng_e = -(-len(lst) // G)
            seq_idx.extend(lst + [DUMMY] * (ng_e * G - len(lst)))
            group_eids.extend([e] * ng_e)
        NG = len(group_eids)
        NGpad = _next_pow2(NG)                            # bucket group count
        group_eids.extend([0] * (NGpad - NG))
        seq_idx.extend([DUMMY] * ((NGpad - NG) * G))

        reps_ext, summaries_ext = expert_step(
            ew, jnp.asarray(np.array(group_eids, np.int32)),
            jnp.asarray(np.array(seq_idx, np.int32)),
            reps_ext, summaries_ext, nhead=nhead, G=G, S=S)
        active = cont

    for orig in active:
        paths[orig].append('T_max')

    logits = final_head(summaries_ext[:B], params['final_norm'][0],
                        params['final_norm'][1], params['lm_head_w'],
                        params['lm_head_b'])

    # eval mode: path/meta/contrastive/q losses are all zero
    aux_loss = DIVERSITY_LOSS_COEF * total_diversity
    return logits, total_entropy, paths, aux_loss


# ----------------------------------------------------------------------------
# Deterministic parameter initialization (weights pre-stacked per expert,
# matmul weights pre-cast to bf16, small per-layer vectors packed)
# ----------------------------------------------------------------------------
def init_params(key, cfg):
    D, V, E = cfg['embed_dim'], cfg['vocab_size'], cfg['num_experts']
    F_, L, RH = cfg['dim_feedforward'], cfg['expert_layers'], cfg['router_hidden_dim']
    nhead = cfg['nhead']
    hd = D // nhead

    keys = iter(jax.random.split(key, 64))
    nk = lambda: next(keys)
    nrm = lambda shape, s=0.02: s * jax.random.normal(nk(), shape, dtype=jnp.float32)
    ones = lambda shape: jnp.ones(shape, jnp.float32)
    zeros = lambda shape: jnp.zeros(shape, jnp.float32)

    p = {}
    p['embedding'] = nrm((V, D)).at[0].set(0.0)                   # padding_idx = 0

    max_len = cfg['max_lm_seq_len']
    position = jnp.arange(max_len, dtype=jnp.float32)[:, None]
    div_term = jnp.exp(jnp.arange(0, D, 2, dtype=jnp.float32)
                       * (-math.log(10000.0) / D))
    pe = jnp.zeros((max_len, D), dtype=jnp.float32)
    pe = pe.at[:, 0::2].set(jnp.sin(position * div_term))
    pe = pe.at[:, 1::2].set(jnp.cos(position * div_term))
    p['pe'] = pe

    p['input_norm'] = (ones((D,)), zeros((D,)))
    p['final_norm'] = (ones((D,)), zeros((D,)))

    # fold 1/sqrt(hd) attention scale into the Q columns of the qkv projection
    inv = 1.0 / math.sqrt(hd)
    w_qkv = nrm((E, L, D, 3 * D)).at[..., :D].multiply(inv)
    b_qkv = zeros((E, L, 1, 3 * D)).at[..., :D].multiply(inv)

    tag = 0.01 * jax.random.normal(nk(), (E, 1, 1, D), dtype=jnp.float32)
    # packed rows: [ln1_g, ln1_b, b_out, b_gate, gn_g, gn_b, ln2_g, ln2_b, b2, tag]
    vec = jnp.concatenate([
        ones((E, L, 1, D)), zeros((E, L, 1, D)),
        zeros((E, L, 1, D)), zeros((E, L, 1, D)),
        ones((E, L, 1, D)), zeros((E, L, 1, D)),
        ones((E, L, 1, D)), zeros((E, L, 1, D)),
        zeros((E, L, 1, D)),
        jnp.broadcast_to(tag, (E, L, 1, D)),
    ], axis=2)

    p['experts'] = {
        'w_qkv': w_qkv.astype(jnp.bfloat16), 'b_qkv': b_qkv,
        'w_out': nrm((E, L, D, D)).astype(jnp.bfloat16),
        'w_gate': nrm((E, L, 2 * D, D)).astype(jnp.bfloat16),     # fused [x;a] gate
        'w1': nrm((E, L, D, F_)).astype(jnp.bfloat16), 'b1': zeros((E, L, 1, F_)),
        'w2': nrm((E, L, F_, D)).astype(jnp.bfloat16),
        'vec': vec,
    }

    p['router'] = {
        'fc1_w': nrm((D, RH)), 'fc1_b': zeros((RH,)),
        'fc2_w': nrm((RH, E + 1)), 'fc2_b': zeros((E + 1,)),
        'norm': (ones((E + 1,)), zeros((E + 1,))),
        'q_values': zeros((E + 1,)),                              # torch.zeros init
    }
    p['lm_head_w'] = nrm((D, V)).astype(jnp.bfloat16)
    p['lm_head_b'] = zeros((V,))
    return p


# ----------------------------------------------------------------------------
if __name__ == "__main__":
    cfg = dict(vocab_size=50, embed_dim=32, num_experts=3, nhead=2,
               dim_feedforward=64, expert_layers=2, router_hidden_dim=32,
               max_path_len=3, max_visits_per_expert=2, max_lm_seq_len=64,
               gumbel_tau_init=1.0)

    key = jax.random.PRNGKey(0)
    pkey, dkey = jax.random.split(key)
    params = init_params(pkey, cfg)

    input_ids = jax.random.randint(dkey, (2, 8), 1, cfg['vocab_size'], dtype=jnp.int32)

    logits, total_entropy, paths, aux_loss = goe_forward(params, cfg, input_ids)
    jax.block_until_ready(logits)
    jax.block_until_ready(total_entropy)
    jax.block_until_ready(aux_loss)

    assert logits.shape == (2, cfg['vocab_size'])
    assert jnp.all(jnp.isfinite(logits))
    assert bool(jnp.isfinite(total_entropy)) and bool(jnp.isfinite(aux_loss))
    print("KERNEL_OK")
</pallas_src>

<mosaic_0001>
module attributes {stable_mosaic.version = 11 : i64} {
  func.func @_embed_norm_kernel(%arg0: i32, %arg1: memref<2x8x32xf32, #tpu.memory_space<vmem>>, %arg2: memref<1x8x32xf32, #tpu.memory_space<vmem>>, %arg3: memref<1x32xf32, #tpu.memory_space<vmem>>, %arg4: memref<1x32xf32, #tpu.memory_space<vmem>>, %arg5: memref<2x8x32xf32, #tpu.memory_space<vmem>>, %arg6: memref<2x1x32xf32, #tpu.memory_space<vmem>>) attributes {dimension_semantics = [#tpu.dimension_semantics<parallel>], iteration_bounds = array<i64: 1>, scalar_prefetch = 0 : i64, scratch_operands = 0 : i64, tpu.core_type = #tpu.core_type<tc>, window_params = [{transform_indices = @transform_0, window_bounds = array<i64: 2, 8, 32>}, {pipeline_mode = #tpu.pipeline_mode<synchronous>, transform_indices = @transform_1, window_bounds = array<i64: 1, 8, 32>}, {pipeline_mode = #tpu.pipeline_mode<synchronous>, transform_indices = @transform_2, window_bounds = array<i64: 1, 32>}, {pipeline_mode = #tpu.pipeline_mode<synchronous>, transform_indices = @transform_3, window_bounds = array<i64: 1, 32>}, {transform_indices = @transform_4, window_bounds = array<i64: 2, 8, 32>}, {transform_indices = @transform_5, window_bounds = array<i64: 2, 1, 32>}]} {
    %c0 = arith.constant 0 : index
    %c0_0 = arith.constant 0 : index
    %c0_1 = arith.constant 0 : index
    %0 = vector.load %arg1[%c0, %c0_0, %c0_1] : memref<2x8x32xf32, #tpu.memory_space<vmem>>, vector<2x8x32xf32>
    %cst = arith.constant 5.65685415 : f32
    %1 = vector.broadcast %cst : f32 to vector<2x8x32xf32>
    %2 = arith.mulf %0, %1 : vector<2x8x32xf32>
    %c0_2 = arith.constant 0 : index
    %c0_3 = arith.constant 0 : index
    %c0_4 = arith.constant 0 : index
    %3 = vector.load %arg2[%c0_2, %c0_3, %c0_4] : memref<1x8x32xf32, #tpu.memory_space<vmem>>, vector<1x8x32xf32>
    %4 = vector.broadcast %3 : vector<1x8x32xf32> to vector<2x8x32xf32>
    %5 = arith.addf %2, %4 : vector<2x8x32xf32>
    %c0_5 = arith.constant 0 : index
    %c0_6 = arith.constant 0 : index
    %6 = vector.load %arg3[%c0_5, %c0_6] : memref<1x32xf32, #tpu.memory_space<vmem>>, vector<1x32xf32>
    %c0_7 = arith.constant 0 : index
    %c0_8 = arith.constant 0 : index
    %7 = vector.load %arg4[%c0_7, %c0_8] : memref<1x32xf32, #tpu.memory_space<vmem>>, vector<1x32xf32>
    %cst_9 = arith.constant dense<0.000000e+00> : vector<2x8xf32>
    %8 = vector.multi_reduction <add>, %5, %cst_9 [2] : vector<2x8x32xf32> to vector<2x8xf32>
    %9 = vector.shape_cast %8 : vector<2x8xf32> to vector<2x8x1xf32>
    %cst_10 = arith.constant 3.200000e+01 : f32
    %10 = vector.broadcast %cst_10 : f32 to vector<2x8x1xf32>
    %11 = arith.divf %9, %10 : vector<2x8x1xf32>
    %12 = vector.broadcast %11 : vector<2x8x1xf32> to vector<2x8x32xf32>
    %13 = arith.subf %5, %12 : vector<2x8x32xf32>
    %14 = arith.mulf %13, %13 : vector<2x8x32xf32>
    %cst_11 = arith.constant dense<0.000000e+00> : vector<2x8xf32>
    %15 = vector.multi_reduction <add>, %14, %cst_11 [2] : vector<2x8x32xf32> to vector<2x8xf32>
    %16 = vector.shape_cast %15 : vector<2x8xf32> to vector<2x8x1xf32>
    %cst_12 = arith.constant 3.200000e+01 : f32
    %17 = vector.broadcast %cst_12 : f32 to vector<2x8x1xf32>
    %18 = arith.divf %16, %17 : vector<2x8x1xf32>
    %19 = vector.broadcast %11 : vector<2x8x1xf32> to vector<2x8x32xf32>
    %20 = arith.subf %5, %19 : vector<2x8x32xf32>
    %cst_13 = arith.constant 9.99999974E-6 : f32
    %21 = vector.broadcast %cst_13 : f32 to vector<2x8x1xf32>
    %22 = arith.addf %18, %21 : vector<2x8x1xf32>
    %23 = math.rsqrt %22 : vector<2x8x1xf32>
    %24 = vector.broadcast %23 : vector<2x8x1xf32> to vector<2x8x32xf32>
    %25 = arith.mulf %20, %24 : vector<2x8x32xf32>
    %26 = vector.shape_cast %6 : vector<1x32xf32> to vector<1x1x32xf32>
    %27 = vector.broadcast %26 : vector<1x1x32xf32> to vector<2x8x32xf32>
    %28 = arith.mulf %25, %27 : vector<2x8x32xf32>
    %29 = vector.shape_cast %7 : vector<1x32xf32> to vector<1x1x32xf32>
    %30 = vector.broadcast %29 : vector<1x1x32xf32> to vector<2x8x32xf32>
    %31 = arith.addf %28, %30 : vector<2x8x32xf32>
    %c0_14 = arith.constant 0 : index
    %c0_15 = arith.constant 0 : index
    %c0_16 = arith.constant 0 : index
    %32 = vector.load %arg5[%c0_14, %c0_15, %c0_16] : memref<2x8x32xf32, #tpu.memory_space<vmem>>, vector<2x8x32xf32>
    tpu.vector_store %arg5[%c0_14, %c0_15, %c0_16], %31 {strides = array<i32>} : memref<2x8x32xf32, #tpu.memory_space<vmem>>, vector<2x8x32xf32>,
    %cst_17 = arith.constant dense<0.000000e+00> : vector<2x32xf32>
    %33 = vector.multi_reduction <add>, %31, %cst_17 [1] : vector<2x8x32xf32> to vector<2x32xf32>
    %34 = vector.shape_cast %33 : vector<2x32xf32> to vector<2x1x32xf32>
    %cst_18 = arith.constant 8.000000e+00 : f32
    %35 = vector.broadcast %cst_18 : f32 to vector<2x1x32xf32>
    %36 = arith.divf %34, %35 : vector<2x1x32xf32>
    %c0_19 = arith.constant 0 : index
    %c0_20 = arith.constant 0 : index
    %c0_21 = arith.constant 0 : index
    %37 = vector.load %arg6[%c0_19, %c0_20, %c0_21] : memref<2x1x32xf32, #tpu.memory_space<vmem>>, vector<2x1x32xf32>
    tpu.vector_store %arg6[%c0_19, %c0_20, %c0_21], %36 {strides = array<i32>} : memref<2x1x32xf32, #tpu.memory_space<vmem>>, vector<2x1x32xf32>,
    return
  }
  func.func @transform_0(%arg0: i32) -> (i32, i32, i32) {
    %c0_i32 = arith.constant 0 : i32
    %c0_i32_0 = arith.constant 0 : i32
    %c0_i32_1 = arith.constant 0 : i32
    return %arg0, %c0_i32, %c0_i32_0 : i32, i32, i32
  }
  func.func @transform_1(%arg0: i32) -> (i32, i32, i32) {
    %c0_i32 = arith.constant 0 : i32
    %c0_i32_0 = arith.constant 0 : i32
    %c0_i32_1 = arith.constant 0 : i32
    %c0_i32_2 = arith.constant 0 : i32
    return %c0_i32, %c0_i32_0, %c0_i32_1 : i32, i32, i32
  }
  func.func @transform_2(%arg0: i32) -> (i32, i32) {
    %c0_i32 = arith.constant 0 : i32
    %c0_i32_0 = arith.constant 0 : i32
    %c0_i32_1 = arith.constant 0 : i32
    return %c0_i32, %c0_i32_0 : i32, i32
  }
  func.func @transform_3(%arg0: i32) -> (i32, i32) {
    %c0_i32 = arith.constant 0 : i32
    %c0_i32_0 = arith.constant 0 : i32
    %c0_i32_1 = arith.constant 0 : i32
    return %c0_i32, %c0_i32_0 : i32, i32
  }
  func.func @transform_4(%arg0: i32) -> (i32, i32, i32) {
    %c0_i32 = arith.constant 0 : i32
    %c0_i32_0 = arith.constant 0 : i32
    %c0_i32_1 = arith.constant 0 : i32
    return %arg0, %c0_i32, %c0_i32_0 : i32, i32, i32
  }
  func.func @transform_5(%arg0: i32) -> (i32, i32, i32) {
    %c0_i32 = arith.constant 0 : i32
    %c0_i32_0 = arith.constant 0 : i32
    %c0_i32_1 = arith.constant 0 : i32
    return %arg0, %c0_i32, %c0_i32_0 : i32, i32, i32
  }
}

</mosaic_0001>

<llo_original>
// kernel: embed_stage.1
$region0: #{embed_stage.1}
  #allocation0 [shape = 'u32[]', space=smem, size = 0x4, offset = 0x4, fixed_abs, tag = 'smem constant byte address 0x4 - core index']
  #allocation1 [shape = 'u32[72,128]{1,0:T(1,128)}', space=vmem, size = 0x9000, scoped, tag = 'internal scratch']
  %s0 = inlined_call_operand.vmem [shape: f32[2,8,32], index: 0, kind: input, shape index: {}]
  %s1 = inlined_call_operand.vmem [shape: f32[1,8,32], index: 1, kind: input, shape index: {}]
  %s2 = inlined_call_operand.vmem [shape: f32[1,32], index: 2, kind: input, shape index: {}]
  %s3 = inlined_call_operand.vmem [shape: f32[1,32], index: 3, kind: input, shape index: {}]
  %s4 = inlined_call_operand.hbm [shape: f32[2,8,32], index: 4, kind: output, shape index: {0}]
  %s5 = inlined_call_operand.hbm [shape: f32[2,1,32], index: 5, kind: output, shape index: {1}]
  %6 = xla_tuple %s4, %s5
  %s7 = sld [smem:[#allocation0]]
  $region34: #{embed_stage.1} parent=0
    _
  %s9 = ssub.s32 1, %s7
  %s10 = scalar_select 0, %s9, %s7
  $region1: #{embed_stage.1} parent=0
    #allocation2 [shape = 'u8[8192]{0}', space=vmem, size = 0x2000, scoped, tag = 'output window, operand 0, single buffered']
    #allocation3 [shape = 's32[1]{0}', space=sflag, size = 0x4, scoped, tag = 'scoped memory for embed_stage.1']
    #allocation4 [shape = 'u8[1024]{0}', space=vmem, size = 0x400, scoped, tag = 'output window, operand 1, single buffered']
    #allocation5 [shape = 's32[1]{0}', space=sflag, size = 0x4, scoped, tag = 'scoped memory for embed_stage.1']
    %11 = vsyncpa [#allocation3], 0
    %12 = vsyncpa [#allocation5], 0
    // Predicated region
    $region2: #{embed_stage.1} parent=1 // pred_check
      _
    $region3: #{embed_stage.1} parent=1 // pred_check_branch
      %14 = sbr.rel (0) target = $region5
    $region4: #{embed_stage.1} parent=1 // pred_region
      _
    $region5: #{embed_stage.1} parent=1 // pred_fallthru
      _
    // Predicated region
    $region6: #{embed_stage.1} parent=1 // pred_check
      _
    $region7: #{embed_stage.1} parent=1 // pred_check_branch
      %16 = sbr.rel (0) target = $region9
    $region8: #{embed_stage.1} parent=1 // pred_region
      _
    $region9: #{embed_stage.1} parent=1 // pred_fallthru
      _
    // Predicated region
    $region10: #{embed_stage.1} parent=1 // pred_check
      _
    $region11: #{embed_stage.1} parent=1 // pred_check_branch
      %18 = sbr.rel (0) target = $region13
    $region12: #{embed_stage.1} parent=1 // pred_region
      _
    $region13: #{embed_stage.1} parent=1 // pred_fallthru
      _
    // Predicated region
    $region14: #{embed_stage.1} parent=1 // pred_check
      _
    $region15: #{embed_stage.1} parent=1 // pred_check_branch
      %20 = sbr.rel (0) target = $region17
    $region16: #{embed_stage.1} parent=1 // pred_region
      _
    $region17: #{embed_stage.1} parent=1 // pred_fallthru
      _
    %v21 = vld [vmem:[%s0] sm:$0xff]
    %v22 = vld [vmem:[%s0 + $0x8] sm:$0xff]
    %v23 = vmul.f32 %v21, 5.656854
    %v24 = vmul.f32 %v22, 5.656854
    %v25 = vld [vmem:[%s1] sm:$0xff]
    %v26 = vadd.f32 %v23, %v25
    %v27 = vadd.f32 %v24, %v25
    %v28 = vld [vmem:[%s2] sm:$0x1]
    %v29 = vld [vmem:[%s3] sm:$0x1]
    %vm30 = vcmask 261120
    %v31 = vsel %vm30, %v26, 0.0
    %32 = vadd.xlane.f32.xlu0 %v31
    %v33 = vpop.xlane.xlu0 %32
    %v34 = vsel %vm30, %v27, 0.0
    %35 = vadd.xlane.f32.xlu0 %v34
    %v36 = vpop.xlane.xlu0 %35
    %v37 = vrcp.pop 32.0
    %v38 = vmul.f32 32.0, %v37
    %v39 = vsub.f32 1.0, %v38
    %v40 = vmul.f32 %v37, %v39
    %v41 = vadd.f32 %v37, %v40
    %vm42 = vweird.f32 %v37
    %v43 = vsel %vm42, %v37, %v41
    %v44 = vmul.f32 %v33, %v43
    %v45 = vmul.f32 %v36, %v43
    %v46 = vsub.f32 %v26, %v44
    %v47 = vsub.f32 %v27, %v45
    %v48 = vmul.f32 %v46, %v46
    %v49 = vmul.f32 %v47, %v47
    %v50 = vsel %vm30, %v48, 0.0
    %51 = vadd.xlane.f32.xlu0 %v50
    %v52 = vpop.xlane.xlu0 %51
    %v53 = vsel %vm30, %v49, 0.0
    %54 = vadd.xlane.f32.xlu0 %v53
    %v55 = vpop.xlane.xlu0 %54
    %v56 = vmul.f32 %v52, %v43
    %v57 = vmul.f32 %v55, %v43
    %v58 = vadd.f32 %v56, 1e-05
    %v59 = vadd.f32 %v57, 1e-05
    %v60 = vrsqrt.pop %v58
    %v61 = vmul.f32 %v60, %v58
    %v62 = vmul.f32 %v61, %v60
    %v63 = vmul.f32 0.5, %v62
    %v64 = vsub.f32 1.5, %v63
    %v65 = vmul.f32 %v60, %v64
    %vm66 = vweird.f32 %v58
    %vm67 = vweird.f32 %v60
    %vm68 = vmor %vm66, %vm67
    %v69 = vsel %vm68, %v60, %v65
    %v70 = vrsqrt.pop %v59
    %v71 = vmul.f32 %v70, %v59
    %v72 = vmul.f32 %v71, %v70
    %v73 = vmul.f32 0.5, %v72
    %v74 = vsub.f32 1.5, %v73
    %v75 = vmul.f32 %v70, %v74
    %vm76 = vweird.f32 %v59
    %vm77 = vweird.f32 %v70
    %vm78 = vmor %vm76, %vm77
    %v79 = vsel %vm78, %v70, %v75
    %v80 = vmul.f32 %v46, %v69
    %v81 = vmul.f32 %v47, %v79
    %v83 = vperm.slane %v28, 0
    %v85 = vmul.f32 %v80, %v83
    %v86 = vmul.f32 %v81, %v83
    %v88 = vperm.slane %v29, 0
    %v90 = vadd.f32 %v85, %v88
    %v91 = vadd.f32 %v86, %v88
    %92 = vst.msk [vmem:[#allocation2] sm:$0xff] %vm30, %v90
    %93 = vst.msk [vmem:[#allocation2 + $0x8] sm:$0xff] %vm30, %v91
    %v94 = vsel %vm30, %v90, 0.0
    %v95 = vrot.slane %v94, 4
    %v96 = vadd.f32 %v94, %v95
    %v97 = vrot.slane %v96, 2
    %v98 = vadd.f32 %v96, %v97
    %v99 = vrot.slane %v98, 1
    %v100 = vadd.f32 %v98, %v99
    %v101 = vsel %vm30, %v91, 0.0
    %v102 = vrot.slane %v101, 4
    %v103 = vadd.f32 %v101, %v102
    %v104 = vrot.slane %v103, 2
    %v105 = vadd.f32 %v103, %v104
    %v106 = vrot.slane %v105, 1
    %v107 = vadd.f32 %v105, %v106
    %v108 = vrcp.pop 8.0
    %v109 = vmul.f32 8.0, %v108
    %v110 = vsub.f32 1.0, %v109
    %v111 = vmul.f32 %v108, %v110
    %v112 = vadd.f32 %v108, %v111
    %vm113 = vweird.f32 %v108
    %v114 = vsel %vm113, %v108, %v112
    %v115 = vmul.f32 %v100, %v114
    %v116 = vmul.f32 %v107, %v114
    %vm117 = vcmask 253952
    %118 = vst.msk [vmem:[#allocation4] sm:$0x1] %vm117, %v115
    %119 = vst.msk [vmem:[#allocation4 + $0x1] sm:$0x1] %vm117, %v116
    // Predicated region
    $region18: #{embed_stage.1} parent=1 // pred_check
      _
    $region19: #{embed_stage.1} parent=1 // pred_check_branch
      %121 = sbr.rel (0) target = $region21
    $region20: #{embed_stage.1} parent=1 // pred_region
      %123 = vsyncadd [#allocation3], 0
      %s124 = sshll.u32 [#allocation2], 4
      %s125 = int_to_ptr.vmem [resolvable:$true] %s124
      %s126 = sshll.u32 %s4, 4
      %s127 = int_to_ptr.hbm [resolvable:$true] %s126
      %132 = dma.vmem_to_hbm [thread:$0]  %s125, 256, %s127, [#allocation3], 128, 128, 8
    $region21: #{embed_stage.1} parent=1 // pred_fallthru
      _
    // Predicated region
    $region22: #{embed_stage.1} parent=1 // pred_check
      _
    $region23: #{embed_stage.1} parent=1 // pred_check_branch
      %134 = sbr.rel (0) target = $region25
    $region24: #{embed_stage.1} parent=1 // pred_region
      %136 = vsyncadd [#allocation5], 0
      %s137 = sshll.u32 [#allocation4], 4
      %s138 = int_to_ptr.vmem [resolvable:$true] %s137
      %s139 = sshll.u32 %s5, 4
      %s140 = int_to_ptr.hbm [resolvable:$true] %s139
      %145 = dma.vmem_to_hbm [thread:$0]  %s138, 32, %s140, [#allocation5], 16, 16, 1
    $region25: #{embed_stage.1} parent=1 // pred_fallthru
      _
    // Predicated region
    $region26: #{embed_stage.1} parent=1 // pred_check
      _
    $region27: #{embed_stage.1} parent=1 // pred_check_branch
      %147 = sbr.rel (0) target = $region29
    $region28: #{embed_stage.1} parent=1 // pred_region
      %149 = dma.done [#allocation3], 256
    $region29: #{embed_stage.1} parent=1 // pred_fallthru
      _
    // Predicated region
    $region30: #{embed_stage.1} parent=1 // pred_check
      _
    $region31: #{embed_stage.1} parent=1 // pred_check_branch
      %151 = sbr.rel (0) target = $region33
    $region32: #{embed_stage.1} parent=1 // pred_region
      %153 = dma.done [#allocation5], 32
    $region33: #{embed_stage.1} parent=1 // pred_fallthru
      _
    %154 = vsyncpa [#allocation3], 1
    %155 = vsyncpa [#allocation5], 1

</llo_original>
